<compile_context>
chip_gen: v5e
topology: v5e:2x2
jax: 0.10.0
libtpu: 0.0.40
codegen_flags: <defaults>
</compile_context>

<pallas_src>
import inspect
import math
from typing import NamedTuple

import jax
import jax.numpy as jnp
from jax.experimental import pallas as pl
from jax.experimental.pallas import tpu as pltpu

LN_EPS = 1e-12
GELU_C = math.sqrt(2.0 / math.pi)
_MiB = 1024 * 1024


def _round_up(x, m):
    return ((x + m - 1) // m) * m


def _pipeline_mode_supported():
    """Feature-check (no call-time try/except): BlockSpec(pipeline_mode=...)."""
    if not hasattr(pl, "Buffered"):
        return False
    try:
        return "pipeline_mode" in inspect.signature(pl.BlockSpec).parameters
    except (TypeError, ValueError):
        return False


_HAS_PIPELINE_MODE = _pipeline_mode_supported()


def _tpu_config():
    """Per-generation tile sizes / VMEM budget."""
    kind = ""
    try:
        kind = jax.devices()[0].device_kind.lower()
    except Exception:  # device query failure -> conservative defaults
        pass
    if "v7" in kind or "7x" in kind:
        # 64 MiB VMEM/TC, 2 TensorCores: moderate tile, keep limit <= 48 MiB.
        return dict(tm=512, tn=2048, vmem=48 * _MiB, two_cores=True)
    if "v6" in kind:
        # 128 MiB VMEM, ~640 FLOP/B ridge: big row tile, raise VMEM limit.
        return dict(tm=1024, tn=2048, vmem=96 * _MiB, two_cores=False)
    if "v5" in kind:
        # ~240 FLOP/B ridge: tm=512 crosses it.
        return dict(tm=512, tn=2048, vmem=64 * _MiB, two_cores=False)
    # Unknown chip: conservative.
    return dict(tm=256, tn=2048, vmem=32 * _MiB, two_cores=True)


class LastLayerParams(NamedTuple):
    """Pre-cast / pre-padded parameters (built ONCE, outside the hot path)."""
    w1_bf: jax.Array    # (H, H)      bf16
    b1: jax.Array       # (1, H)      f32
    gamma: jax.Array    # (1, H)      f32
    beta: jax.Array     # (1, H)      f32
    w2_bf: jax.Array    # (H, o_pad)  bf16, zero-padded columns
    b2: jax.Array       # (1, o_pad)  f32,  zero-padded
    o_dim: int          # true output dim O
    tn_eff: int         # lane-dense column tile the padding was built for


def prepare_last_layer_params(w1, b1, gamma, beta, w2, b2, *, tn=None):
    """Cast weights to bf16 and pad the decoder to a lane-dense column tile.

    Call once at parameter-load time; per-step calls then avoid the extra HBM
    read+write passes over W2 that a per-call cast/pad would cost (for
    vocab-sized O these are comparable to the kernel's own W2 traffic).
    Weights are stored transposed vs torch.nn.Linear, i.e. (in, out).
    """
    if tn is None:
        tn = _tpu_config()["tn"]
    H = w1.shape[0]
    O = w2.shape[1]
    tn_eff = min(tn, _round_up(O, 128))
    o_pad = _round_up(O, tn_eff)
    w2_bf = w2.astype(jnp.bfloat16)
    b2_f = b2.astype(jnp.float32)
    if o_pad != O:
        w2_bf = jnp.pad(w2_bf, ((0, 0), (0, o_pad - O)))
        b2_f = jnp.pad(b2_f, (0, o_pad - O))
    return LastLayerParams(
        w1_bf=w1.astype(jnp.bfloat16),
        b1=b1.reshape(1, H).astype(jnp.float32),
        gamma=gamma.reshape(1, H).astype(jnp.float32),
        beta=beta.reshape(1, H).astype(jnp.float32),
        w2_bf=w2_bf,
        b2=b2_f.reshape(1, o_pad),
        o_dim=O,
        tn_eff=tn_eff,
    )


def _last_layer_kernel(x_ref, w1_ref, b1_ref, gamma_ref, beta_ref,
                       w2_ref, b2_ref, o_ref, ln_ref):
    # Grid = (row tiles "parallel", decoder column tiles "arbitrary").
    # NOTE: the ln_ref cache is ONLY valid because the column axis is the
    # innermost grid axis, runs in order ("arbitrary"), and j == 0 is visited
    # first for every row tile.  Do not reorder the grid or mark the column
    # axis "parallel".
    j = pl.program_id(1)

    # dense + gelu_new + LayerNorm: compute once per row tile, cache in VMEM.
    @pl.when(j == 0)
    def _():
        x = x_ref[...].astype(jnp.bfloat16)   # in-kernel cast: no wrapper pass
        h = jnp.dot(x, w1_ref[...], preferred_element_type=jnp.float32)
        h = h + b1_ref[...]
        # gelu_new (tanh approximation; matches ACT2FN['gelu_new'])
        h = 0.5 * h * (1.0 + jnp.tanh(GELU_C * (h + 0.044715 * h * h * h)))
        # LayerNorm over last dim (biased variance, eps = 1e-12), f32 math.
        mean = jnp.mean(h, axis=-1, keepdims=True)
        centered = h - mean
        var = jnp.mean(centered * centered, axis=-1, keepdims=True)
        ln = centered * jax.lax.rsqrt(var + LN_EPS)
        ln = ln * gamma_ref[...] + beta_ref[...]
        # bf16 cache: intentional precision trade (bf16 MXU inputs for the
        # decoder matmul); the decoder accumulation below stays f32.
        ln_ref[...] = ln.astype(ln_ref.dtype)

    # decoder column tile: (tm, H) @ (H, tn) + (1, tn); bf16 in, f32 acc.
    out = jnp.dot(ln_ref[...], w2_ref[...],
                  preferred_element_type=jnp.float32) + b2_ref[...]
    o_ref[...] = out.astype(o_ref.dtype)


def last_layer(hidden_states, params: LastLayerParams, *, tm=None,
               out_dtype=None):
    """hidden_states: (B, S, H) -> (B, S, O).

    out_dtype defaults to hidden_states.dtype; pass jnp.bfloat16 to halve the
    (N, O) writeback stream when downstream tolerates bf16 logits.
    """
    cfg = _tpu_config()
    if tm is None:
        tm = cfg["tm"]
    B, S, H = hidden_states.shape
    N = B * S
    o_pad = params.w2_bf.shape[1]
    tn_eff = params.tn_eff
    O = params.o_dim
    if out_dtype is None:
        out_dtype = hidden_states.dtype

    # Row tile: multiple of 8, no larger than the (padded) row count.
    tm_eff = max(8, min(tm, _round_up(N, 8)))
    # v7x (2 TensorCores): keep the 'parallel' row axis at >= 2 iterations
    # whenever N is big enough to split, so both cores stay busy.
    if cfg["two_cores"] and N >= 16:
        tm_eff = min(tm_eff, _round_up((N + 1) // 2, 8))

    # W2 pipeline depth: 3-deep hides the x-tile DMA bubble at each i
    # boundary; only worthwhile (and only requested) with >= 3 column tiles.
    n_j = o_pad // tn_eff
    w2_bufs = 3 if (_HAS_PIPELINE_MODE and n_j >= 3) else 2

    # VMEM feasibility: shrink the row tile (never the lane-dense column
    # tile) until the estimate fits the per-generation budget.
    out_isz = jnp.dtype(out_dtype).itemsize

    def vmem_estimate(tm_, bufs):
        return (2 * tm_ * H * 4                           # x tile (f32), 2 bufs
                + 2 * H * H * 2                           # W1 bf16 (invariant)
                + 2 * 3 * H * 4                           # b1 / gamma / beta
                + bufs * (H * tn_eff * 2 + tn_eff * 4)    # W2 + b2 tiles
                + 2 * tm_ * tn_eff * out_isz              # output tile, 2 bufs
                + tm_ * H * 2                             # ln cache (bf16)
                + 4 * tm_ * H * 4)                        # f32 GELU/LN temps

    budget = cfg["vmem"] - 4 * _MiB
    if w2_bufs == 3 and vmem_estimate(tm_eff, w2_bufs) > budget:
        w2_bufs = 2
    while tm_eff > 64 and vmem_estimate(tm_eff, w2_bufs) > budget:
        tm_eff = max(64, _round_up(tm_eff // 2, 8))

    n_pad = _round_up(N, tm_eff)
    grid = (n_pad // tm_eff, n_j)

    # Flatten rows and zero-pad; NO dtype cast here (done in-kernel).
    x2d = hidden_states.reshape(N, H)
    if n_pad != N:
        x2d = jnp.pad(x2d, ((0, n_pad - N), (0, 0)))

    w2_kwargs = {}
    if _HAS_PIPELINE_MODE and w2_bufs != 2:
        w2_kwargs = dict(pipeline_mode=pl.Buffered(w2_bufs))

    out2d = pl.pallas_call(
        _last_layer_kernel,
        out_shape=jax.ShapeDtypeStruct((n_pad, o_pad), out_dtype),
        grid_spec=pltpu.PrefetchScalarGridSpec(
            num_scalar_prefetch=0,
            grid=grid,
            in_specs=[
                pl.BlockSpec((tm_eff, H), lambda i, j: (i, 0)),     # x rows (f32)
                pl.BlockSpec((H, H), lambda i, j: (0, 0)),          # W1 (invariant)
                pl.BlockSpec((1, H), lambda i, j: (0, 0)),          # b1
                pl.BlockSpec((1, H), lambda i, j: (0, 0)),          # LN gamma
                pl.BlockSpec((1, H), lambda i, j: (0, 0)),          # LN beta
                pl.BlockSpec((H, tn_eff), lambda i, j: (0, j),
                             **w2_kwargs),                          # W2 cols
                pl.BlockSpec((1, tn_eff), lambda i, j: (0, j)),     # b2 cols
            ],
            out_specs=pl.BlockSpec((tm_eff, tn_eff), lambda i, j: (i, j)),
            scratch_shapes=[pltpu.VMEM((tm_eff, H), jnp.bfloat16)],  # LN cache
        ),
        compiler_params=pltpu.CompilerParams(
            # Row tiles are independent (megacore-parallel on v7x); the column
            # axis MUST stay "arbitrary" (in-order) for the ln cache to hold.
            dimension_semantics=("parallel", "arbitrary"),
            vmem_limit_bytes=cfg["vmem"],
        ),
    )(x2d, params.w1_bf, params.b1, params.gamma, params.beta,
      params.w2_bf, params.b2)

    return out2d[:N, :O].reshape(B, S, O)


def reference(hidden_states, w1, b1, gamma, beta, w2, b2):
    h = jnp.einsum("bsh,hk->bsk", hidden_states, w1) + b1
    h = 0.5 * h * (1.0 + jnp.tanh(GELU_C * (h + 0.044715 * h ** 3)))
    mean = jnp.mean(h, axis=-1, keepdims=True)
    var = jnp.mean((h - mean) ** 2, axis=-1, keepdims=True)
    ln = (h - mean) * jax.lax.rsqrt(var + LN_EPS) * gamma + beta
    return jnp.einsum("bsh,ho->bso", ln, w2) + b2


if __name__ == "__main__":
    # Small shapes consistent with the module's forward:
    # batch=2, seq=8, hidden_size=32, o_dim=16
    B, S, H, O = 2, 8, 32, 16

    key = jax.random.PRNGKey(0)
    k_x, k_w1, k_b1, k_g, k_bta, k_w2 = jax.random.split(key, 6)

    x = jax.random.normal(k_x, (B, S, H), dtype=jnp.float32)

    # Parameters (shapes from __init__); weights stored as (in, out).
    w1 = jax.random.normal(k_w1, (H, H), dtype=jnp.float32) * 0.02
    b1 = jax.random.normal(k_b1, (H,), dtype=jnp.float32) * 0.02
    gamma = jnp.ones((H,), dtype=jnp.float32) + 0.01 * jax.random.normal(k_g, (H,))
    beta = 0.01 * jax.random.normal(k_bta, (H,), dtype=jnp.float32)
    w2 = jax.random.normal(k_w2, (H, O), dtype=jnp.float32) * 0.02
    b2 = jnp.zeros((O,), dtype=jnp.float32)   # nn.Parameter(torch.zeros(o_dim))

    # Weight prep happens ONCE here, outside the per-call hot path.
    params = prepare_last_layer_params(w1, b1, gamma, beta, w2, b2)

    out = last_layer(x, params)
    out = jax.block_until_ready(out)

    ref = reference(x, w1, b1, gamma, beta, w2, b2)
    assert out.shape == (B, S, O)
    # bf16 matmul inputs / bf16 LN cache (f32 accumulation) => loosened
    # tolerance vs the f32 reference; intentional precision trade.
    assert jnp.allclose(out, ref, atol=2e-2, rtol=2e-2), float(
        jnp.max(jnp.abs(out - ref)))

    print("KERNEL_OK")
</pallas_src>

<mosaic_0001>
module attributes {stable_mosaic.version = 11 : i64} {
  func.func @_last_layer_kernel(%arg0: i32, %arg1: i32, %arg2: memref<8x32xf32, #tpu.memory_space<vmem>>, %arg3: memref<32x32xbf16, #tpu.memory_space<vmem>>, %arg4: memref<1x32xf32, #tpu.memory_space<vmem>>, %arg5: memref<1x32xf32, #tpu.memory_space<vmem>>, %arg6: memref<1x32xf32, #tpu.memory_space<vmem>>, %arg7: memref<32x128xbf16, #tpu.memory_space<vmem>>, %arg8: memref<1x128xf32, #tpu.memory_space<vmem>>, %arg9: memref<8x128xf32, #tpu.memory_space<vmem>>, %arg10: memref<8x32xbf16, #tpu.memory_space<vmem>>) attributes {dimension_semantics = [#tpu.dimension_semantics<parallel>, #tpu.dimension_semantics<arbitrary>], iteration_bounds = array<i64: 2, 1>, scalar_prefetch = 0 : i64, scratch_operands = 1 : i64, tpu.core_type = #tpu.core_type<tc>, window_params = [{transform_indices = @transform_0, window_bounds = array<i64: 8, 32>}, {pipeline_mode = #tpu.pipeline_mode<synchronous>, transform_indices = @transform_1, window_bounds = array<i64: 32, 32>}, {pipeline_mode = #tpu.pipeline_mode<synchronous>, transform_indices = @transform_2, window_bounds = array<i64: 1, 32>}, {pipeline_mode = #tpu.pipeline_mode<synchronous>, transform_indices = @transform_3, window_bounds = array<i64: 1, 32>}, {pipeline_mode = #tpu.pipeline_mode<synchronous>, transform_indices = @transform_4, window_bounds = array<i64: 1, 32>}, {transform_indices = @transform_5, window_bounds = array<i64: 32, 128>}, {transform_indices = @transform_6, window_bounds = array<i64: 1, 128>}, {transform_indices = @transform_7, window_bounds = array<i64: 8, 128>}]} {
    %c0_i32 = arith.constant 0 : i32
    %0 = arith.cmpi eq, %arg1, %c0_i32 : i32
    %1 = arith.extui %0 : i1 to i32
    %c0_i32_0 = arith.constant 0 : i32
    %2 = arith.cmpi ne, %1, %c0_i32_0 : i32
    scf.if %2 {
      %c0_8 = arith.constant 0 : index
      %c0_9 = arith.constant 0 : index
      %10 = vector.load %arg2[%c0_8, %c0_9] : memref<8x32xf32, #tpu.memory_space<vmem>>, vector<8x32xf32>
      %11 = arith.truncf %10 : vector<8x32xf32> to vector<8x32xbf16>
      %c0_10 = arith.constant 0 : index
      %c0_11 = arith.constant 0 : index
      %12 = vector.load %arg3[%c0_10, %c0_11] : memref<32x32xbf16, #tpu.memory_space<vmem>>, vector<32x32xbf16>
      %cst_12 = arith.constant dense<0.000000e+00> : vector<8x32xf32>
      %13 = tpu.matmul %11, %12, %cst_12 {dimension_numbers = #tpu.dot_dimension_numbers<[1], [0], [0], [1], [0, 0, 1, 1], [], []>} : vector<8x32xbf16>, vector<32x32xbf16>, vector<8x32xf32> -> vector<8x32xf32>
      %c0_13 = arith.constant 0 : index
      %c0_14 = arith.constant 0 : index
      %14 = vector.load %arg4[%c0_13, %c0_14] : memref<1x32xf32, #tpu.memory_space<vmem>>, vector<1x32xf32>
      %15 = vector.broadcast %14 : vector<1x32xf32> to vector<8x32xf32>
      %16 = arith.addf %13, %15 : vector<8x32xf32>
      %cst_15 = arith.constant 5.000000e-01 : f32
      %17 = vector.broadcast %cst_15 : f32 to vector<8x32xf32>
      %18 = arith.mulf %17, %16 : vector<8x32xf32>
      %cst_16 = arith.constant 4.471500e-02 : f32
      %19 = vector.broadcast %cst_16 : f32 to vector<8x32xf32>
      %20 = arith.mulf %19, %16 : vector<8x32xf32>
      %21 = arith.mulf %20, %16 : vector<8x32xf32>
      %22 = arith.mulf %21, %16 : vector<8x32xf32>
      %23 = arith.addf %16, %22 : vector<8x32xf32>
      %cst_17 = arith.constant 0.797884583 : f32
      %24 = vector.broadcast %cst_17 : f32 to vector<8x32xf32>
      %25 = arith.mulf %24, %23 : vector<8x32xf32>
      %26 = math.tanh %25 : vector<8x32xf32>
      %cst_18 = arith.constant 1.000000e+00 : f32
      %27 = vector.broadcast %cst_18 : f32 to vector<8x32xf32>
      %28 = arith.addf %27, %26 : vector<8x32xf32>
      %29 = arith.mulf %18, %28 : vector<8x32xf32>
      %cst_19 = arith.constant dense<0.000000e+00> : vector<8xf32>
      %30 = vector.multi_reduction <add>, %29, %cst_19 [1] : vector<8x32xf32> to vector<8xf32>
      %31 = vector.shape_cast %30 : vector<8xf32> to vector<8x1xf32>
      %cst_20 = arith.constant 3.200000e+01 : f32
      %32 = vector.broadcast %cst_20 : f32 to vector<8x1xf32>
      %33 = arith.divf %31, %32 : vector<8x1xf32>
      %34 = vector.broadcast %33 : vector<8x1xf32> to vector<8x32xf32>
      %35 = arith.subf %29, %34 : vector<8x32xf32>
      %36 = arith.mulf %35, %35 : vector<8x32xf32>
      %cst_21 = arith.constant dense<0.000000e+00> : vector<8xf32>
      %37 = vector.multi_reduction <add>, %36, %cst_21 [1] : vector<8x32xf32> to vector<8xf32>
      %38 = vector.shape_cast %37 : vector<8xf32> to vector<8x1xf32>
      %cst_22 = arith.constant 3.200000e+01 : f32
      %39 = vector.broadcast %cst_22 : f32 to vector<8x1xf32>
      %40 = arith.divf %38, %39 : vector<8x1xf32>
      %cst_23 = arith.constant 9.99999996E-13 : f32
      %41 = vector.broadcast %cst_23 : f32 to vector<8x1xf32>
      %42 = arith.addf %40, %41 : vector<8x1xf32>
      %43 = math.rsqrt %42 : vector<8x1xf32>
      %44 = vector.broadcast %43 : vector<8x1xf32> to vector<8x32xf32>
      %45 = arith.mulf %35, %44 : vector<8x32xf32>
      %c0_24 = arith.constant 0 : index
      %c0_25 = arith.constant 0 : index
      %46 = vector.load %arg5[%c0_24, %c0_25] : memref<1x32xf32, #tpu.memory_space<vmem>>, vector<1x32xf32>
      %47 = vector.broadcast %46 : vector<1x32xf32> to vector<8x32xf32>
      %48 = arith.mulf %45, %47 : vector<8x32xf32>
      %c0_26 = arith.constant 0 : index
      %c0_27 = arith.constant 0 : index
      %49 = vector.load %arg6[%c0_26, %c0_27] : memref<1x32xf32, #tpu.memory_space<vmem>>, vector<1x32xf32>
      %50 = vector.broadcast %49 : vector<1x32xf32> to vector<8x32xf32>
      %51 = arith.addf %48, %50 : vector<8x32xf32>
      %52 = arith.truncf %51 : vector<8x32xf32> to vector<8x32xbf16>
      %c0_28 = arith.constant 0 : index
      %c0_29 = arith.constant 0 : index
      %53 = vector.load %arg10[%c0_28, %c0_29] : memref<8x32xbf16, #tpu.memory_space<vmem>>, vector<8x32xbf16>
      tpu.vector_store %arg10[%c0_28, %c0_29], %52 {strides = array<i32>} : memref<8x32xbf16, #tpu.memory_space<vmem>>, vector<8x32xbf16>,
    } else {
    }
    %c0 = arith.constant 0 : index
    %c0_1 = arith.constant 0 : index
    %3 = vector.load %arg10[%c0, %c0_1] : memref<8x32xbf16, #tpu.memory_space<vmem>>, vector<8x32xbf16>
    %c0_2 = arith.constant 0 : index
    %c0_3 = arith.constant 0 : index
    %4 = vector.load %arg7[%c0_2, %c0_3] : memref<32x128xbf16, #tpu.memory_space<vmem>>, vector<32x128xbf16>
    %cst = arith.constant dense<0.000000e+00> : vector<8x128xf32>
    %5 = tpu.matmul %3, %4, %cst {dimension_numbers = #tpu.dot_dimension_numbers<[1], [0], [0], [1], [0, 0, 1, 1], [], []>} : vector<8x32xbf16>, vector<32x128xbf16>, vector<8x128xf32> -> vector<8x128xf32>
    %c0_4 = arith.constant 0 : index
    %c0_5 = arith.constant 0 : index
    %6 = vector.load %arg8[%c0_4, %c0_5] : memref<1x128xf32, #tpu.memory_space<vmem>>, vector<1x128xf32>
    %7 = vector.broadcast %6 : vector<1x128xf32> to vector<8x128xf32>
    %8 = arith.addf %5, %7 : vector<8x128xf32>
    %c0_6 = arith.constant 0 : index
    %c0_7 = arith.constant 0 : index
    %9 = vector.load %arg9[%c0_6, %c0_7] : memref<8x128xf32, #tpu.memory_space<vmem>>, vector<8x128xf32>
    tpu.vector_store %arg9[%c0_6, %c0_7], %8 {strides = array<i32>} : memref<8x128xf32, #tpu.memory_space<vmem>>, vector<8x128xf32>,
    return
  }
  func.func @transform_0(%arg0: i32, %arg1: i32) -> (i32, i32) {
    %c0_i32 = arith.constant 0 : i32
    %c0_i32_0 = arith.constant 0 : i32
    return %arg0, %c0_i32 : i32, i32
  }
  func.func @transform_1(%arg0: i32, %arg1: i32) -> (i32, i32) {
    %c0_i32 = arith.constant 0 : i32
    %c0_i32_0 = arith.constant 0 : i32
    %c0_i32_1 = arith.constant 0 : i32
    return %c0_i32, %c0_i32_0 : i32, i32
  }
  func.func @transform_2(%arg0: i32, %arg1: i32) -> (i32, i32) {
    %c0_i32 = arith.constant 0 : i32
    %c0_i32_0 = arith.constant 0 : i32
    %c0_i32_1 = arith.constant 0 : i32
    return %c0_i32, %c0_i32_0 : i32, i32
  }
  func.func @transform_3(%arg0: i32, %arg1: i32) -> (i32, i32) {
    %c0_i32 = arith.constant 0 : i32
    %c0_i32_0 = arith.constant 0 : i32
    %c0_i32_1 = arith.constant 0 : i32
    return %c0_i32, %c0_i32_0 : i32, i32
  }
  func.func @transform_4(%arg0: i32, %arg1: i32) -> (i32, i32) {
    %c0_i32 = arith.constant 0 : i32
    %c0_i32_0 = arith.constant 0 : i32
    %c0_i32_1 = arith.constant 0 : i32
    return %c0_i32, %c0_i32_0 : i32, i32
  }
  func.func @transform_5(%arg0: i32, %arg1: i32) -> (i32, i32) {
    %c0_i32 = arith.constant 0 : i32
    %c0_i32_0 = arith.constant 0 : i32
    return %c0_i32, %arg1 : i32, i32
  }
  func.func @transform_6(%arg0: i32, %arg1: i32) -> (i32, i32) {
    %c0_i32 = arith.constant 0 : i32
    %c0_i32_0 = arith.constant 0 : i32
    return %c0_i32, %arg1 : i32, i32
  }
  func.func @transform_7(%arg0: i32, %arg1: i32) -> (i32, i32) {
    %c0_i32 = arith.constant 0 : i32
    return %arg0, %arg1 : i32, i32
  }
}

</mosaic_0001>

<llo_original>
// kernel: tpu_custom_call.1
$region0: #{tpu_custom_call.1}
  #allocation0 [shape = 'u32[]', space=smem, size = 0x4, offset = 0x4, fixed_abs, tag = 'smem constant byte address 0x4 - core index']
  #allocation1 [shape = 'u32[72,128]{1,0:T(1,128)}', space=vmem, size = 0x9000, scoped, tag = 'internal scratch']
  #allocation2 [shape = 'bf16[8,32]{1,0:T(8,128)(2,1)}', space=vmem, size = 0x800, scoped, tag = 'scratch operand']
  %s0 = inlined_call_operand.hbm [shape: f32[16,32], index: 0, kind: input, shape index: {}]
  %s1 = inlined_call_operand.hbm [shape: bf16[32,32], index: 1, kind: input, shape index: {}]
  %s2 = inlined_call_operand.vmem [shape: f32[1,32], index: 2, kind: input, shape index: {}]
  %s3 = inlined_call_operand.vmem [shape: f32[1,32], index: 3, kind: input, shape index: {}]
  %s4 = inlined_call_operand.vmem [shape: f32[1,32], index: 4, kind: input, shape index: {}]
  %s5 = inlined_call_operand.hbm [shape: bf16[32,128], index: 5, kind: input, shape index: {}]
  %s6 = inlined_call_operand.vmem [shape: f32[1,128], index: 6, kind: input, shape index: {}]
  %s7 = inlined_call_operand.hbm [shape: f32[16,128], index: 7, kind: output, shape index: {}]
  %s8 = sld [smem:[#allocation0]]
  $region77: #{tpu_custom_call.1} parent=0
    _
  %s10 = ssub.s32 1, %s8
  %s11 = scalar_select 0, %s10, %s8
  $region1: #{tpu_custom_call.1} parent=0
    #allocation3 [shape = 'u8[8192]{0}', space=vmem, size = 0x2000, scoped, tag = 'input window, operand 0']
    #allocation4 [shape = 's32[2]{0}', space=sflag, size = 0x8, scoped, tag = 'scoped memory for tpu_custom_call.1']
    #allocation5 [shape = 's32[2]{0}', space=sflag, size = 0x8, scoped, tag = 'scoped memory for tpu_custom_call.1']
    #allocation6 [shape = 'u8[8192]{0}', space=vmem, size = 0x2000, scoped, tag = 'input window, operand 1, single buffered']
    #allocation7 [shape = 's32[1]{0}', space=sflag, size = 0x4, scoped, tag = 'scoped memory for tpu_custom_call.1']
    #allocation8 [shape = 'u8[8192]{0}', space=vmem, size = 0x2000, scoped, tag = 'input window, operand 5, single buffered']
    #allocation9 [shape = 'u8[8192]{0}', space=vmem, size = 0x2000, scoped, tag = 'output window, operand 0']
    %12 = vsyncpa [#allocation4], 0
    %s13 = scalar_lea.sflag [#allocation4], 1
    %14 = vsyncpa %s13, 0
    %15 = vsyncpa [#allocation7], 0
    %16 = vsyncpa [#allocation5], 0
    %s17 = scalar_lea.sflag [#allocation5], 1
    %18 = vsyncpa %s17, 0
    loop: start=0, step=1, limit=4
    $region2: #{tpu_custom_call.1} parent=1 // loop_pre_header
      _
    $region3: #{tpu_custom_call.1} parent=1 // loop_header
      %s20 = sphi 0, %s24
      %p21 = scmp.ge.s32.totalorder %s20, 4
      %s27 = sphi 0, %s39
      %s28 = sphi 0, %s35
      %s29 = sphi 0, %s27
      %s30 = sphi 0, %s28
      %s31 = sphi 0, %s29
      %s32 = sphi 0, %s30
      %s42 = sphi 0, %s44
      %s45 = sphi 0, %s42
      %s46 = sphi 0, %s45
      %s62 = sphi 0, %s46
      %s66 = sphi 0, %s66
      %s68 = sphi 0, %s66
      %s69 = sphi 0, %s68
      %s83 = sphi 0, %s69
      %s87 = sphi 0, %s87
      %s89 = sphi 0, %s87
      %s90 = sphi 0, %s89
      %s104 = sphi 0, %s90
      %s108 = sphi 0, %s108
      %s110 = sphi 0, %s108
      %s111 = sphi 0, %s110
      %s125 = sphi 0, %s111
      %s129 = sphi 0, %s129
      %s131 = sphi 0, %s129
      %s132 = sphi 0, %s131
      %s146 = sphi 0, %s132
      %s152 = sphi 0, %s154
      %s155 = sphi 0, %s152
      %s156 = sphi 0, %s155
      %s172 = sphi 0, %s156
      %s178 = sphi 0, %s180
      %s181 = sphi 0, %s178
      %s182 = sphi 0, %s181
      %s198 = sphi 0, %s182
      %s206 = sphi 0, %s208
      %s209 = sphi 0, %s206
      %s210 = sphi 0, %s209
      %s226 = sphi 0, %s210
    $region4: #{tpu_custom_call.1} parent=1 // loop_header_branch
      %23 = sbr.rel (%p21) target = $region8
    $region5: #{tpu_custom_call.1} parent=1 // loop_body
      %s25 = ssub.s32 %s20, 1
      %s26 = ssub.s32 %s20, 2
      %s33 = sadd.s32 1, %s28
      %p34 = scmp.ge.s32.totalorder %s33, 1
      %s35 = scalar_select %p34, 0, %s33
      %s36 = sadd.s32 1, %s27
      %s37 = scalar_select %p34, %s36, %s27
      %p38 = scmp.ge.s32.totalorder %s37, 2
      %s39 = scalar_select %p38, 0, %s37
      %s40 = ssub.s32 %s27, %s39
      %p41 = scmp.eq.s32.totalorder %s40, 0
      %s43 = sadd.s32 %s42, 1
      %s44 = scalar_select %p41, %s42, %s43
      %p47 = pneg %p41
      %p48 = scmp.eq.s32.totalorder %s20, 1
      %p49 = por %p47, %p48
      %p50 = scmp.ne.s32.totalorder %s42, %s45
      %p51 = scmp.eq.s32.totalorder %s20, 0
      %p52 = por %p50, %p51
      %p53 = scmp.ne.s32.totalorder %s42, %s45
      %p54 = scmp.eq.s32.totalorder %s25, 1
      %p55 = por %p53, %p54
      %p56 = scmp.ne.s32.totalorder %s45, %s46
      %p57 = scmp.eq.s32.totalorder %s25, 0
      %p58 = por %p56, %p57
      %p59 = scmp.ne.s32.totalorder %s45, %s46
      %p60 = scmp.eq.s32.totalorder %s26, 1
      %p61 = por %p59, %p60
      %p63 = scmp.ne.s32.totalorder %s46, %s62
      %p64 = scmp.eq.s32.totalorder %s26, 0
      %p65 = por %p63, %p64
      %s67 = sadd.s32 %s66, 1
      %p70 = scmp.eq.s32.totalorder %s20, 1
      %p71 = scmp.ne.s32.totalorder %s66, %s68
      %p72 = scmp.eq.s32.totalorder %s20, 0
      %p73 = por %p71, %p72
      %p74 = scmp.ne.s32.totalorder %s66, %s68
      %p75 = scmp.eq.s32.totalorder %s25, 1
      %p76 = por %p74, %p75
      %p77 = scmp.ne.s32.totalorder %s68, %s69
      %p78 = scmp.eq.s32.totalorder %s25, 0
      %p79 = por %p77, %p78
      %p80 = scmp.ne.s32.totalorder %s68, %s69
      %p81 = scmp.eq.s32.totalorder %s26, 1
      %p82 = por %p80, %p81
      %p84 = scmp.ne.s32.totalorder %s69, %s83
      %p85 = scmp.eq.s32.totalorder %s26, 0
      %p86 = por %p84, %p85
      %s88 = sadd.s32 %s87, 1
      %p91 = scmp.eq.s32.totalorder %s20, 1
      %p92 = scmp.ne.s32.totalorder %s87, %s89
      %p93 = scmp.eq.s32.totalorder %s20, 0
      %p94 = por %p92, %p93
      %p95 = scmp.ne.s32.totalorder %s87, %s89
      %p96 = scmp.eq.s32.totalorder %s25, 1
      %p97 = por %p95, %p96
      %p98 = scmp.ne.s32.totalorder %s89, %s90
      %p99 = scmp.eq.s32.totalorder %s25, 0
      %p100 = por %p98, %p99
      %p101 = scmp.ne.s32.totalorder %s89, %s90
      %p102 = scmp.eq.s32.totalorder %s26, 1
      %p103 = por %p101, %p102
      %p105 = scmp.ne.s32.totalorder %s90, %s104
      %p106 = scmp.eq.s32.totalorder %s26, 0
      %p107 = por %p105, %p106
      %s109 = sadd.s32 %s108, 1
      %p112 = scmp.eq.s32.totalorder %s20, 1
      %p113 = scmp.ne.s32.totalorder %s108, %s110
      %p114 = scmp.eq.s32.totalorder %s20, 0
      %p115 = por %p113, %p114
      %p116 = scmp.ne.s32.totalorder %s108, %s110
      %p117 = scmp.eq.s32.totalorder %s25, 1
      %p118 = por %p116, %p117
      %p119 = scmp.ne.s32.totalorder %s110, %s111
      %p120 = scmp.eq.s32.totalorder %s25, 0
      %p121 = por %p119, %p120
      %p122 = scmp.ne.s32.totalorder %s110, %s111
      %p123 = scmp.eq.s32.totalorder %s26, 1
      %p124 = por %p122, %p123
      %p126 = scmp.ne.s32.totalorder %s111, %s125
      %p127 = scmp.eq.s32.totalorder %s26, 0
      %p128 = por %p126, %p127
      %s130 = sadd.s32 %s129, 1
      %p133 = scmp.eq.s32.totalorder %s20, 1
      %p134 = scmp.ne.s32.totalorder %s129, %s131
      %p135 = scmp.eq.s32.totalorder %s20, 0
      %p136 = por %p134, %p135
      %p137 = scmp.ne.s32.totalorder %s129, %s131
      %p138 = scmp.eq.s32.totalorder %s25, 1
      %p139 = por %p137, %p138
      %p140 = scmp.ne.s32.totalorder %s131, %s132
      %p141 = scmp.eq.s32.totalorder %s25, 0
      %p142 = por %p140, %p141
      %p143 = scmp.ne.s32.totalorder %s131, %s132
      %p144 = scmp.eq.s32.totalorder %s26, 1
      %p145 = por %p143, %p144
      %p147 = scmp.ne.s32.totalorder %s132, %s146
      %p148 = scmp.eq.s32.totalorder %s26, 0
      %p149 = por %p147, %p148
      %s150 = ssub.s32 %s28, %s35
      %p151 = scmp.eq.s32.totalorder %s150, 0
      %s153 = sadd.s32 %s152, 1
      %s154 = scalar_select %p151, %s152, %s153
      %p157 = pneg %p151
      %p158 = scmp.eq.s32.totalorder %s20, 1
      %p159 = por %p157, %p158
      %p160 = scmp.ne.s32.totalorder %s152, %s155
      %p161 = scmp.eq.s32.totalorder %s20, 0
      %p162 = por %p160, %p161
      %p163 = scmp.ne.s32.totalorder %s152, %s155
      %p164 = scmp.eq.s32.totalorder %s25, 1
      %p165 = por %p163, %p164
      %p166 = scmp.ne.s32.totalorder %s155, %s156
      %p167 = scmp.eq.s32.totalorder %s25, 0
      %p168 = por %p166, %p167
      %p169 = scmp.ne.s32.totalorder %s155, %s156
      %p170 = scmp.eq.s32.totalorder %s26, 1
      %p171 = por %p169, %p170
      %p173 = scmp.ne.s32.totalorder %s156, %s172
      %p174 = scmp.eq.s32.totalorder %s26, 0
      %p175 = por %p173, %p174
      %s176 = ssub.s32 %s28, %s35
      %p177 = scmp.eq.s32.totalorder %s176, 0
      %s179 = sadd.s32 %s178, 1
      %s180 = scalar_select %p177, %s178, %s179
      %p183 = pneg %p177
      %p184 = scmp.eq.s32.totalorder %s20, 1
      %p185 = por %p183, %p184
      %p186 = scmp.ne.s32.totalorder %s178, %s181
      %p187 = scmp.eq.s32.totalorder %s20, 0
      %p188 = por %p186, %p187
      %p189 = scmp.ne.s32.totalorder %s178, %s181
      %p190 = scmp.eq.s32.totalorder %s25, 1
      %p191 = por %p189, %p190
      %p192 = scmp.ne.s32.totalorder %s181, %s182
      %p193 = scmp.eq.s32.totalorder %s25, 0
      %p194 = por %p192, %p193
      %p195 = scmp.ne.s32.totalorder %s181, %s182
      %p196 = scmp.eq.s32.totalorder %s26, 1
      %p197 = por %p195, %p196
      %p199 = scmp.ne.s32.totalorder %s182, %s198
      %p200 = scmp.eq.s32.totalorder %s26, 0
      %p201 = por %p199, %p200
      %s202 = ssub.s32 %s27, %s39
      %s203 = ssub.s32 %s28, %s35
      %s204 = sor.u32 %s202, %s203
      %p205 = scmp.eq.s32.totalorder %s204, 0
      %s207 = sadd.s32 %s206, 1
      %s208 = scalar_select %p205, %s206, %s207
      %p211 = pneg %p205
      %p212 = scmp.eq.s32.totalorder %s20, 1
      %p213 = por %p211, %p212
      %p214 = scmp.ne.s32.totalorder %s206, %s209
      %p215 = scmp.eq.s32.totalorder %s20, 0
      %p216 = por %p214, %p215
      %p217 = scmp.ne.s32.totalorder %s206, %s209
      %p218 = scmp.eq.s32.totalorder %s25, 1
      %p219 = por %p217, %p218
      %p220 = scmp.ne.s32.totalorder %s209, %s210
      %p221 = scmp.eq.s32.totalorder %s25, 0
      %p222 = por %p220, %p221
      %p223 = scmp.ne.s32.totalorder %s209, %s210
      %p224 = scmp.eq.s32.totalorder %s26, 1
      %p225 = por %p223, %p224
      %p227 = scmp.ne.s32.totalorder %s210, %s226
      %p228 = scmp.eq.s32.totalorder %s26, 0
      %p229 = por %p227, %p228
      %p230 = scmp.le.s32.totalorder 1, %s20
      %p231 = scmp.lt.s32.totalorder %s20, 3
      %p232 = pnand %p230, %p231
      %p233 = pneg %p232
      // Predicated region
      $region9: #{tpu_custom_call.1} parent=5 // pred_check
        _
      $region10: #{tpu_custom_call.1} parent=5 // pred_check_branch
        %235 = sbr.rel (%p232) target = $region12
      $region11: #{tpu_custom_call.1} parent=5 // pred_region
        %s236 = ssub.s32 %s20, 1
        // Predicated region
        $region13: #{tpu_custom_call.1} parent=11 // pred_check
          %p237 = pneg %p79
        $region14: #{tpu_custom_call.1} parent=11 // pred_check_branch
          %239 = sbr.rel (%p237) target = $region16
        $region15: #{tpu_custom_call.1} parent=11 // pred_region
          %241 = vsyncadd [#allocation7], 0
          %s242 = sshll.u32 %s1, 4
          %s243 = int_to_ptr.hbm [resolvable:$true] %s242
          %s244 = sshll.u32 [#allocation6], 4
          %s245 = int_to_ptr.vmem [resolvable:$true] %s244
          %250 = dma.hbm_to_vmem [thread:$0]  %s243, 256, %s245, [#allocation7], 64, 64, 4
        $region16: #{tpu_custom_call.1} parent=11 // pred_fallthru
          _
        // Predicated region
        $region17: #{tpu_custom_call.1} parent=11 // pred_check
          %p251 = pneg %p100
        $region18: #{tpu_custom_call.1} parent=11 // pred_check_branch
          %253 = sbr.rel (%p251) target = $region20
        $region19: #{tpu_custom_call.1} parent=11 // pred_region
          _
        $region20: #{tpu_custom_call.1} parent=11 // pred_fallthru
          _
        // Predicated region
        $region21: #{tpu_custom_call.1} parent=11 // pred_check
          %p254 = pneg %p121
        $region22: #{tpu_custom_call.1} parent=11 // pred_check_branch
          %256 = sbr.rel (%p254) target = $region24
        $region23: #{tpu_custom_call.1} parent=11 // pred_region
          _
        $region24: #{tpu_custom_call.1} parent=11 // pred_fallthru
          _
        // Predicated region
        $region25: #{tpu_custom_call.1} parent=11 // pred_check
          %p257 = pneg %p142
        $region26: #{tpu_custom_call.1} parent=11 // pred_check_branch
          %259 = sbr.rel (%p257) target = $region28
        $region27: #{tpu_custom_call.1} parent=11 // pred_region
          _
        $region28: #{tpu_custom_call.1} parent=11 // pred_fallthru
          _
        // Predicated region
        $region29: #{tpu_custom_call.1} parent=11 // pred_check
          %p260 = pneg %p168
        $region30: #{tpu_custom_call.1} parent=11 // pred_check_branch
          %262 = sbr.rel (%p260) target = $region32
        $region31: #{tpu_custom_call.1} parent=11 // pred_region
          %264 = vsyncadd [#allocation7], 0
          %s265 = smul.addr %s30, 4
          %s266 = scalar_lea.hbm %s5, %s265
          %s267 = sshll.u32 %s266, 4
          %s268 = int_to_ptr.hbm [resolvable:$true] %s267
          %s269 = sshll.u32 [#allocation8], 4
          %s270 = int_to_ptr.vmem [resolvable:$true] %s269
          %275 = dma.hbm_to_vmem [thread:$0]  %s268, 256, %s270, [#allocation7], 64, 64, 4
        $region32: #{tpu_custom_call.1} parent=11 // pred_fallthru
          _
        // Predicated region
        $region33: #{tpu_custom_call.1} parent=11 // pred_check
          %p276 = pneg %p194
        $region34: #{tpu_custom_call.1} parent=11 // pred_check_branch
          %278 = sbr.rel (%p276) target = $region36
        $region35: #{tpu_custom_call.1} parent=11 // pred_region
          %p279 = scmp.lt.s32.totalorder %s30, 0
          %s280 = scalar_select %p279, %s30, 0
          %s281 = scalar_lea.vmem %s6, %s280
        $region36: #{tpu_custom_call.1} parent=11 // pred_fallthru
          _
      $region12: #{tpu_custom_call.1} parent=5 // pred_fallthru
        _
      %p282 = scmp.lt.s32.totalorder %s20, 2
      // Predicated region
      $region37: #{tpu_custom_call.1} parent=5 // pred_check
        %p283 = pneg %p282
      $region38: #{tpu_custom_call.1} parent=5 // pred_check_branch
        %285 = sbr.rel (%p283) target = $region40
      $region39: #{tpu_custom_call.1} parent=5 // pred_region
        // Predicated region
        $region41: #{tpu_custom_call.1} parent=39 // pred_check
          %p286 = pneg %p52
        $region42: #{tpu_custom_call.1} parent=39 // pred_check_branch
          %288 = sbr.rel (%p286) target = $region44
        $region43: #{tpu_custom_call.1} parent=39 // pred_region
          %s289 = sand.u32 %s42, 1
          %s290 = scalar_lea.sflag [#allocation4], %s289
          %s291 = sand.u32 %s42, 1
          %s292 = smul.addr %s291, 8
          %s293 = scalar_lea.vmem [#allocation3], %s292
          %295 = vsyncadd %s290, 0
          %s296 = smul.addr %s27, 8
          %s297 = scalar_lea.hbm %s0, %s296
          %s299 = sshll.u32 %s297, 4
          %s300 = int_to_ptr.hbm [resolvable:$true] %s299
          %s301 = sshll.u32 %s293, 4
          %s302 = int_to_ptr.vmem [resolvable:$true] %s301
          %304 = dma.hbm_to_vmem [thread:$0]  %s300, 128, %s302, %s290
        $region44: #{tpu_custom_call.1} parent=39 // pred_fallthru
          _
      $region40: #{tpu_custom_call.1} parent=5 // pred_fallthru
        _
      %p305 = scmp.le.s32.totalorder 1, %s20
      %p306 = scmp.lt.s32.totalorder %s20, 3
      %p307 = pnand %p305, %p306
      %p308 = pneg %p307
      // Predicated region
      $region45: #{tpu_custom_call.1} parent=5 // pred_check
        _
      $region46: #{tpu_custom_call.1} parent=5 // pred_check_branch
        %310 = sbr.rel (%p307) target = $region48
      $region47: #{tpu_custom_call.1} parent=5 // pred_region
        %s311 = ssub.s32 %s20, 1
        %s312 = sand.u32 %s45, 1
        %s313 = scalar_lea.sflag [#allocation4], %s312
        %s314 = sand.u32 %s45, 1
        %s315 = smul.addr %s314, 8
        %s316 = scalar_lea.vmem [#allocation3], %s315
        // Predicated region
        $region49: #{tpu_custom_call.1} parent=47 // pred_check
          %p317 = pneg %p58
        $region50: #{tpu_custom_call.1} parent=47 // pred_check_branch
          %319 = sbr.rel (%p317) target = $region52
        $region51: #{tpu_custom_call.1} parent=47 // pred_region
          %321 = dma.done %s313, 128
        $region52: #{tpu_custom_call.1} parent=47 // pred_fallthru
          _
        // Predicated region
        $region53: #{tpu_custom_call.1} parent=47 // pred_check
          %p322 = pneg %p79
        $region54: #{tpu_custom_call.1} parent=47 // pred_check_branch
          %324 = sbr.rel (%p322) target = $region56
        $region55: #{tpu_custom_call.1} parent=47 // pred_region
          %326 = dma.done [#allocation7], 256
        $region56: #{tpu_custom_call.1} parent=47 // pred_fallthru
          _
        // Predicated region
        $region57: #{tpu_custom_call.1} parent=47 // pred_check
          %p327 = pneg %p168
        $region58: #{tpu_custom_call.1} parent=47 // pred_check_branch
          %329 = sbr.rel (%p327) target = $region60
        $region59: #{tpu_custom_call.1} parent=47 // pred_region
          %331 = dma.done [#allocation7], 256
        $region60: #{tpu_custom_call.1} parent=47 // pred_fallthru
          _
        %s332 = sand.u32 %s45, 1
        %s333 = scalar_lea.sflag [#allocation4], %s332
        %s334 = sand.u32 %s45, 1
        %s335 = smul.addr %s334, 8
        %s336 = scalar_lea.vmem [#allocation3], %s335
        %p337 = pneg %p58
        %p338 = pneg %p55
        %p339 = pneg %p79
        %p340 = pneg %p76
        %p341 = pneg %p100
        %p342 = pneg %p97
        %p343 = pneg %p121
        %p344 = pneg %p118
        %p345 = pneg %p142
        %p346 = pneg %p139
        %p347 = pneg %p168
        %p348 = pneg %p165
        %p349 = scmp.lt.s32.totalorder %s30, 0
        %s350 = scalar_select %p349, %s30, 0
        %s351 = scalar_lea.vmem %s6, %s350
        %p352 = pneg %p194
        %p353 = pneg %p191
        %p354 = pneg %p222
        %p355 = pneg %p219
        %s356 = sand.u32 %s209, 1
        %s357 = scalar_lea.sflag [#allocation5], %s356
        %s358 = sand.u32 %s209, 1
        %s359 = smul.addr %s358, 8
        %s360 = scalar_lea.vmem [#allocation9], %s359
        %p361 = scmp.lt.s32.totalorder %s30, 0
        %s362 = scalar_select %p361, %s30, 0
        %s363 = scalar_lea.vmem %s6, %s362
        %p365 = scmp.eq.s32.totalorder %s30, 0
        // Predicated region
        $region61: #{tpu_custom_call.1} parent=47 // pred_check
          %p366 = pneg %p365
        $region62: #{tpu_custom_call.1} parent=47 // pred_check_branch
          %368 = sbr.rel (%p366) target = $region64
        $region63: #{tpu_custom_call.1} parent=47 // pred_region
          %v369 = vld [vmem:[%s316] sm:$0xff]
          %v370 = vpack.c.bf16 %v369, %v369
          %v371 = vld [vmem:[#allocation6] sm:$0xf]
          %v372 = vld [vmem:[#allocation6 + $0x4] sm:$0xf]
          %v373 = vld [vmem:[#allocation6 + $0x8] sm:$0xf]
          %v374 = vld [vmem:[#allocation6 + $0xc] sm:$0xf]
          %v375 = vld [vmem:[%s2] sm:$0x1]
          %v377 = vperm.slane %v375, 0
          %v383 = vunpack.c.l.b16 %v371
          %v384 = vunpack.c.l.b16 %v372
          %v385 = vunpack.c.l.b16 %v373
          %v386 = vunpack.c.l.b16 %v374
          %v387 = vpack.c.b16 %v384, %v383
          %v388 = vpack.c.b16 %v386, %v385
          %vm391 = vcmask 261120
          %v393 = vsel %vm391, %v370, 0
          %395 = vmatpush.bf16.msra.mxu0 0
          %396 = vmatpush.bf16.msra.mxu0 0
          %397 = vmatpush.bf16.msra.mxu0 0
          %398 = vmatpush.bf16.msra.mxu0 0
          %399 = vmatpush.bf16.msra.mxu0 0
          %400 = vmatpush.bf16.msra.mxu0 0
          %401 = vmatpush.bf16.msra.mxu0 %v388
          %402 = vmatpush.bf16.msra.mxu0 %v387
          %403 = vmatmul.bf16.gmra.mxu0 %v393
          %v404 = vpop.f32.mrf.mxu0
          %v405 = vadd.f32 %v377, %v404
          %v406 = vpop.f32.mrf.mxu0
          %407 = vdwg.mxu0
          %v408 = vmul.f32 %v405, 0.5
          %v409 = vmul.f32 %v405, 0.044715
          %v410 = vmul.f32 %v409, %v405
          %v411 = vmul.f32 %v410, %v405
          %v412 = vadd.f32 %v405, %v411
          %v413 = vmul.f32 %v412, 0.7978846
          %v414 = vtanh.pop %v413
          %v415 = vadd.f32 %v414, 1.0
          %v416 = vmul.f32 %v408, %v415
          %v417 = vsel %vm391, %v416, 0.0
          %418 = vadd.xlane.f32.xlu0 %v417
          %v419 = vpop.xlane.xlu0 %418
          %v420 = vrcp.pop 32.0
          %v421 = vmul.f32 32.0, %v420
          %v422 = vsub.f32 1.0, %v421
          %v423 = vmul.f32 %v420, %v422
          %v424 = vadd.f32 %v420, %v423
          %vm425 = vweird.f32 %v420
          %v426 = vsel %vm425, %v420, %v424
          %v427 = vmul.f32 %v419, %v426
          %v428 = vsub.f32 %v416, %v427
          %v429 = vmul.f32 %v428, %v428
          %v430 = vsel %vm391, %v429, 0.0
          %431 = vadd.xlane.f32.xlu0 %v430
          %v432 = vpop.xlane.xlu0 %431
          %v433 = vmul.f32 %v432, %v426
          %v434 = vadd.f32 %v433, 1e-12
          %v435 = vrsqrt.pop %v434
          %v436 = vmul.f32 %v435, %v434
          %v437 = vmul.f32 %v436, %v435
          %v438 = vmul.f32 0.5, %v437
          %v439 = vsub.f32 1.5, %v438
          %v440 = vmul.f32 %v435, %v439
          %vm441 = vweird.f32 %v434
          %vm442 = vweird.f32 %v435
          %vm443 = vmor %vm441, %vm442
          %v444 = vsel %vm443, %v435, %v440
          %v445 = vmul.f32 %v428, %v444
          %v446 = vld [vmem:[%s3] sm:$0x1]
          %v448 = vperm.slane %v446, 0
          %v450 = vmul.f32 %v445, %v448
          %v451 = vld [vmem:[%s4] sm:$0x1]
          %v453 = vperm.slane %v451, 0
          %v455 = vadd.f32 %v450, %v453
          %v456 = vpack.c.bf16 %v455, %v455
          %vm457 = vcmask 257024
          %458 = vst.msk [vmem:[#allocation2] sm:$0xf] %vm457, %v456
        $region64: #{tpu_custom_call.1} parent=47 // pred_fallthru
          _
        %v459 = vld [vmem:[#allocation2] sm:$0xf]
        %v460 = vld [vmem:[#allocation8] sm:$0xf]
        %v461 = vld [vmem:[#allocation8 + $0x4] sm:$0xf]
        %v462 = vld [vmem:[#allocation8 + $0x8] sm:$0xf]
        %v463 = vld [vmem:[#allocation8 + $0xc] sm:$0xf]
        %v464 = vld [vmem:[%s363] sm:$0x1]
        %v466 = vperm.slane %v464, 0
        %v472 = vunpack.c.l.b16 %v460
        %v473 = vunpack.c.l.b16 %v461
        %v474 = vunpack.c.l.b16 %v462
        %v475 = vunpack.c.l.b16 %v463
        %v476 = vpack.c.b16 %v473, %v472
        %v477 = vpack.c.b16 %v475, %v474
        %vm480 = vcmask 261120
        %v482 = vsel %vm480, %v459, 0
        %484 = vmatpush.bf16.msra.mxu0 0
        %485 = vmatpush.bf16.msra.mxu0 0
        %486 = vmatpush.bf16.msra.mxu0 0
        %487 = vmatpush.bf16.msra.mxu0 0
        %488 = vmatpush.bf16.msra.mxu0 0
        %489 = vmatpush.bf16.msra.mxu0 0
        %490 = vmatpush.bf16.msra.mxu0 %v477
        %491 = vmatpush.bf16.msra.mxu0 %v476
        %492 = vmatmul.bf16.gmra.mxu0 %v482
        %v493 = vpop.f32.mrf.mxu0
        %v494 = vadd.f32 %v466, %v493
        %v495 = vpop.f32.mrf.mxu0
        %496 = vdwg.mxu0
        %497 = vst [vmem:[%s360] sm:$0xff] %v494
        %s498 = sand.u32 %s209, 1
        %s499 = scalar_lea.sflag [#allocation5], %s498
        %s500 = sand.u32 %s209, 1
        %s501 = smul.addr %s500, 8
        %s502 = scalar_lea.vmem [#allocation9], %s501
        // Predicated region
        $region65: #{tpu_custom_call.1} parent=47 // pred_check
          %p503 = pneg %p219
        $region66: #{tpu_custom_call.1} parent=47 // pred_check_branch
          %505 = sbr.rel (%p503) target = $region68
        $region67: #{tpu_custom_call.1} parent=47 // pred_region
          %507 = vsyncadd %s499, 0
          %s508 = sadd.s32 %s30, %s29
          %s509 = smul.addr %s508, 8
          %s510 = scalar_lea.hbm %s7, %s509
          %s512 = sshll.u32 %s502, 4
          %s513 = int_to_ptr.vmem [resolvable:$true] %s512
          %s514 = sshll.u32 %s510, 4
          %s515 = int_to_ptr.hbm [resolvable:$true] %s514
          %517 = dma.vmem_to_hbm [thread:$0]  %s513, 128, %s515, %s499
        $region68: #{tpu_custom_call.1} parent=47 // pred_fallthru
          _
      $region48: #{tpu_custom_call.1} parent=5 // pred_fallthru
        _
      %p518 = scmp.le.s32.totalorder 2, %s20
      // Predicated region
      $region69: #{tpu_custom_call.1} parent=5 // pred_check
        %p519 = pneg %p518
      $region70: #{tpu_custom_call.1} parent=5 // pred_check_branch
        %521 = sbr.rel (%p519) target = $region72
      $region71: #{tpu_custom_call.1} parent=5 // pred_region
        %s522 = ssub.s32 %s20, 2
        // Predicated region
        $region73: #{tpu_custom_call.1} parent=71 // pred_check
          %p523 = pneg %p225
        $region74: #{tpu_custom_call.1} parent=71 // pred_check_branch
          %525 = sbr.rel (%p523) target = $region76
        $region75: #{tpu_custom_call.1} parent=71 // pred_region
          %s526 = sand.u32 %s210, 1
          %s527 = scalar_lea.sflag [#allocation5], %s526
          %s528 = sand.u32 %s210, 1
          %s529 = smul.addr %s528, 8
          %s530 = scalar_lea.vmem [#allocation9], %s529
          %532 = dma.done %s527, 128
        $region76: #{tpu_custom_call.1} parent=71 // pred_fallthru
          _
      $region72: #{tpu_custom_call.1} parent=5 // pred_fallthru
        _
    $region6: #{tpu_custom_call.1} parent=1 // loop_footer
      %s24 = sadd.s32 1, %s20
    $region7: #{tpu_custom_call.1} parent=1 // loop_footer_branch
      %19 = sbr.rel target = $region3
    $region8: #{tpu_custom_call.1} parent=1 // loop_exit
      _
    %533 = vsyncpa [#allocation4], 1
    %s534 = scalar_lea.sflag [#allocation4], 1
    %535 = vsyncpa %s534, 1
    %536 = vsyncpa [#allocation7], 1
    %537 = vsyncpa [#allocation5], 1
    %s538 = scalar_lea.sflag [#allocation5], 1
    %539 = vsyncpa %s538, 1

</llo_original>
